<compile_context>
chip_gen: v5e
topology: v5e:2x2
jax: 0.10.0
libtpu: 0.0.40
codegen_flags: <defaults>
</compile_context>

<pallas_src>
import jax
import jax.numpy as jnp
from jax.experimental import pallas as pl
from jax.experimental.pallas import tpu as pltpu


def lr_kernel(fids_t_ref, emb_ref, out_ref):
    """One batch tile: compare-based gather + weighted sublane reduce, lane-dense store."""
    fids_t = fids_t_ref[...]       # (F, TB) int32 — batch on the 128-lane axis
    emb_col = emb_ref[...]         # (V, 1)  f32   — scalar LR weight per fid id (grid-resident)
    F, TB = fids_t.shape
    V = emb_col.shape[0]

    # counts[v, b] = #{f : fids[b, f] == v}, built directly in the (V-on-sublane,
    # B-on-lane) orientation so the result is already lane-dense.
    iota_v = jax.lax.broadcasted_iota(jnp.int32, (V, TB), 0)
    counts = jnp.zeros((V, TB), dtype=jnp.float32)
    for f in range(F):  # F is static -> unrolled at trace time (VPU compares/adds)
        counts = counts + (fids_t[f:f + 1, :] == iota_v).astype(jnp.float32)

    # logits[b] = sum_v counts[v, b] * emb[v]  (VPU multiply + sublane reduce, no MXU)
    out_ref[...] = jnp.sum(counts * emb_col, axis=0, keepdims=True)   # (1, TB)

    # TODO(synk): for very large V, tile V across a second ("arbitrary") grid axis with a
    # VMEM accumulator + pl.when, or switch to a DMA/gather path instead of a (V, TB) slab.


def lr_forward(fids_batch, emb_table, *, block_b=128):
    """Pallas-backed LRModel.forward.

    fids_batch: (B, F) int fid ids per sample.
    emb_table : (V,) or (V, 1) f32 scalar LR weight per fid id.
    returns   : (B,) f32 logits (prediction.squeeze()).
    """
    fids_batch = jnp.asarray(fids_batch, jnp.int32)
    B, F = fids_batch.shape
    V = emb_table.size
    emb_col = emb_table.reshape(V, 1).astype(jnp.float32)   # sublane-aligned weight column

    # Batch tile: lane-dense multiple of 128 when possible, else one full-batch block.
    tb = block_b if B >= block_b else B
    num_blocks = -(-B // tb)
    Bp = num_blocks * tb

    fids_t = fids_batch.T                                   # (F, B): batch -> lane axis
    if Bp != B:
        fids_t = jnp.pad(fids_t, ((0, 0), (0, Bp - B)))     # padded cols discarded below

    out = pl.pallas_call(
        lr_kernel,
        out_shape=jax.ShapeDtypeStruct((1, Bp), jnp.float32),
        grid=(num_blocks,),
        in_specs=[
            pl.BlockSpec((F, tb), lambda i: (0, i)),        # fids tile per grid step
            pl.BlockSpec((V, 1), lambda i: (0, 0)),         # emb table resident across grid
        ],
        out_specs=pl.BlockSpec((1, tb), lambda i: (0, i)),  # lane-dense output row
        compiler_params=pltpu.CompilerParams(dimension_semantics=("parallel",)),
    )(fids_t, emb_col)
    return out[0, :B]


if __name__ == "__main__":
    key = jax.random.PRNGKey(0)
    k_emb, k_fid1, k_fid2 = jax.random.split(key, 3)

    V = 128   # vocab of fid ids
    F = 16    # fids per sample

    # Deterministic parameter init (synthetic "fidembeding" table of scalar weights).
    emb_table = jax.random.normal(k_emb, (V, 1), dtype=jnp.float32)
    # The PyTorch module's `dummy` parameter (zeros(1)) is unused in forward.
    dummy = jnp.zeros((1,), dtype=jnp.float32)  # noqa: F841

    ok = True
    for B, k_fid in ((8, k_fid1), (256, k_fid2)):   # single-block and gridded paths
        fids_batch = jax.random.randint(k_fid, (B, F), 0, V, dtype=jnp.int32)
        pred = lr_forward(fids_batch, emb_table)
        pred = jax.block_until_ready(pred)

        # Reference (plain JAX gather + sum), matches torch semantics.
        ref = jnp.sum(jnp.take(emb_table[:, 0], fids_batch, axis=0), axis=1)
        ok &= (pred.shape == (B,)) and bool(jnp.allclose(pred, ref, atol=1e-5, rtol=1e-5))

    assert ok
    print("KERNEL_OK")
</pallas_src>

<mosaic_0001>
module attributes {stable_mosaic.version = 11 : i64} {
  func.func @lr_kernel(%arg0: i32, %arg1: memref<16x8xi32, #tpu.memory_space<vmem>>, %arg2: memref<128x1xf32, #tpu.memory_space<vmem>>, %arg3: memref<1x8xf32, #tpu.memory_space<vmem>>) attributes {dimension_semantics = [#tpu.dimension_semantics<parallel>], iteration_bounds = array<i64: 1>, scalar_prefetch = 0 : i64, scratch_operands = 0 : i64, tpu.core_type = #tpu.core_type<tc>, window_params = [{transform_indices = @transform_0, window_bounds = array<i64: 16, 8>}, {pipeline_mode = #tpu.pipeline_mode<synchronous>, transform_indices = @transform_1, window_bounds = array<i64: 128, 1>}, {transform_indices = @transform_2, window_bounds = array<i64: 1, 8>}]} {
    %c0 = arith.constant 0 : index
    %c0_0 = arith.constant 0 : index
    %0 = vector.load %arg1[%c0, %c0_0] : memref<16x8xi32, #tpu.memory_space<vmem>>, vector<16x8xi32>
    %c0_1 = arith.constant 0 : index
    %c0_2 = arith.constant 0 : index
    %1 = vector.load %arg2[%c0_1, %c0_2] : memref<128x1xf32, #tpu.memory_space<vmem>>, vector<128x1xf32>
    %2 = tpu.iota {dimensions = array<i32: 0>} : vector<128x8xi32>
    %cst = arith.constant 0.000000e+00 : f32
    %3 = vector.broadcast %cst : f32 to vector<128x8xf32>
    %4 = vector.extract_strided_slice %0 {offsets = [0, 0], sizes = [1, 8], strides = [1, 1]} : vector<16x8xi32> to vector<1x8xi32>
    %5 = vector.broadcast %4 : vector<1x8xi32> to vector<128x8xi32>
    %6 = arith.cmpi eq, %5, %2 : vector<128x8xi32>
    %7 = arith.extui %6 : vector<128x8xi1> to vector<128x8xi32>
    %8 = arith.sitofp %7 : vector<128x8xi32> to vector<128x8xf32>
    %9 = arith.addf %3, %8 : vector<128x8xf32>
    %10 = vector.extract_strided_slice %0 {offsets = [1, 0], sizes = [1, 8], strides = [1, 1]} : vector<16x8xi32> to vector<1x8xi32>
    %11 = vector.broadcast %10 : vector<1x8xi32> to vector<128x8xi32>
    %12 = arith.cmpi eq, %11, %2 : vector<128x8xi32>
    %13 = arith.extui %12 : vector<128x8xi1> to vector<128x8xi32>
    %14 = arith.sitofp %13 : vector<128x8xi32> to vector<128x8xf32>
    %15 = arith.addf %9, %14 : vector<128x8xf32>
    %16 = vector.extract_strided_slice %0 {offsets = [2, 0], sizes = [1, 8], strides = [1, 1]} : vector<16x8xi32> to vector<1x8xi32>
    %17 = vector.broadcast %16 : vector<1x8xi32> to vector<128x8xi32>
    %18 = arith.cmpi eq, %17, %2 : vector<128x8xi32>
    %19 = arith.extui %18 : vector<128x8xi1> to vector<128x8xi32>
    %20 = arith.sitofp %19 : vector<128x8xi32> to vector<128x8xf32>
    %21 = arith.addf %15, %20 : vector<128x8xf32>
    %22 = vector.extract_strided_slice %0 {offsets = [3, 0], sizes = [1, 8], strides = [1, 1]} : vector<16x8xi32> to vector<1x8xi32>
    %23 = vector.broadcast %22 : vector<1x8xi32> to vector<128x8xi32>
    %24 = arith.cmpi eq, %23, %2 : vector<128x8xi32>
    %25 = arith.extui %24 : vector<128x8xi1> to vector<128x8xi32>
    %26 = arith.sitofp %25 : vector<128x8xi32> to vector<128x8xf32>
    %27 = arith.addf %21, %26 : vector<128x8xf32>
    %28 = vector.extract_strided_slice %0 {offsets = [4, 0], sizes = [1, 8], strides = [1, 1]} : vector<16x8xi32> to vector<1x8xi32>
    %29 = vector.broadcast %28 : vector<1x8xi32> to vector<128x8xi32>
    %30 = arith.cmpi eq, %29, %2 : vector<128x8xi32>
    %31 = arith.extui %30 : vector<128x8xi1> to vector<128x8xi32>
    %32 = arith.sitofp %31 : vector<128x8xi32> to vector<128x8xf32>
    %33 = arith.addf %27, %32 : vector<128x8xf32>
    %34 = vector.extract_strided_slice %0 {offsets = [5, 0], sizes = [1, 8], strides = [1, 1]} : vector<16x8xi32> to vector<1x8xi32>
    %35 = vector.broadcast %34 : vector<1x8xi32> to vector<128x8xi32>
    %36 = arith.cmpi eq, %35, %2 : vector<128x8xi32>
    %37 = arith.extui %36 : vector<128x8xi1> to vector<128x8xi32>
    %38 = arith.sitofp %37 : vector<128x8xi32> to vector<128x8xf32>
    %39 = arith.addf %33, %38 : vector<128x8xf32>
    %40 = vector.extract_strided_slice %0 {offsets = [6, 0], sizes = [1, 8], strides = [1, 1]} : vector<16x8xi32> to vector<1x8xi32>
    %41 = vector.broadcast %40 : vector<1x8xi32> to vector<128x8xi32>
    %42 = arith.cmpi eq, %41, %2 : vector<128x8xi32>
    %43 = arith.extui %42 : vector<128x8xi1> to vector<128x8xi32>
    %44 = arith.sitofp %43 : vector<128x8xi32> to vector<128x8xf32>
    %45 = arith.addf %39, %44 : vector<128x8xf32>
    %46 = vector.extract_strided_slice %0 {offsets = [7, 0], sizes = [1, 8], strides = [1, 1]} : vector<16x8xi32> to vector<1x8xi32>
    %47 = vector.broadcast %46 : vector<1x8xi32> to vector<128x8xi32>
    %48 = arith.cmpi eq, %47, %2 : vector<128x8xi32>
    %49 = arith.extui %48 : vector<128x8xi1> to vector<128x8xi32>
    %50 = arith.sitofp %49 : vector<128x8xi32> to vector<128x8xf32>
    %51 = arith.addf %45, %50 : vector<128x8xf32>
    %52 = vector.extract_strided_slice %0 {offsets = [8, 0], sizes = [1, 8], strides = [1, 1]} : vector<16x8xi32> to vector<1x8xi32>
    %53 = vector.broadcast %52 : vector<1x8xi32> to vector<128x8xi32>
    %54 = arith.cmpi eq, %53, %2 : vector<128x8xi32>
    %55 = arith.extui %54 : vector<128x8xi1> to vector<128x8xi32>
    %56 = arith.sitofp %55 : vector<128x8xi32> to vector<128x8xf32>
    %57 = arith.addf %51, %56 : vector<128x8xf32>
    %58 = vector.extract_strided_slice %0 {offsets = [9, 0], sizes = [1, 8], strides = [1, 1]} : vector<16x8xi32> to vector<1x8xi32>
    %59 = vector.broadcast %58 : vector<1x8xi32> to vector<128x8xi32>
    %60 = arith.cmpi eq, %59, %2 : vector<128x8xi32>
    %61 = arith.extui %60 : vector<128x8xi1> to vector<128x8xi32>
    %62 = arith.sitofp %61 : vector<128x8xi32> to vector<128x8xf32>
    %63 = arith.addf %57, %62 : vector<128x8xf32>
    %64 = vector.extract_strided_slice %0 {offsets = [10, 0], sizes = [1, 8], strides = [1, 1]} : vector<16x8xi32> to vector<1x8xi32>
    %65 = vector.broadcast %64 : vector<1x8xi32> to vector<128x8xi32>
    %66 = arith.cmpi eq, %65, %2 : vector<128x8xi32>
    %67 = arith.extui %66 : vector<128x8xi1> to vector<128x8xi32>
    %68 = arith.sitofp %67 : vector<128x8xi32> to vector<128x8xf32>
    %69 = arith.addf %63, %68 : vector<128x8xf32>
    %70 = vector.extract_strided_slice %0 {offsets = [11, 0], sizes = [1, 8], strides = [1, 1]} : vector<16x8xi32> to vector<1x8xi32>
    %71 = vector.broadcast %70 : vector<1x8xi32> to vector<128x8xi32>
    %72 = arith.cmpi eq, %71, %2 : vector<128x8xi32>
    %73 = arith.extui %72 : vector<128x8xi1> to vector<128x8xi32>
    %74 = arith.sitofp %73 : vector<128x8xi32> to vector<128x8xf32>
    %75 = arith.addf %69, %74 : vector<128x8xf32>
    %76 = vector.extract_strided_slice %0 {offsets = [12, 0], sizes = [1, 8], strides = [1, 1]} : vector<16x8xi32> to vector<1x8xi32>
    %77 = vector.broadcast %76 : vector<1x8xi32> to vector<128x8xi32>
    %78 = arith.cmpi eq, %77, %2 : vector<128x8xi32>
    %79 = arith.extui %78 : vector<128x8xi1> to vector<128x8xi32>
    %80 = arith.sitofp %79 : vector<128x8xi32> to vector<128x8xf32>
    %81 = arith.addf %75, %80 : vector<128x8xf32>
    %82 = vector.extract_strided_slice %0 {offsets = [13, 0], sizes = [1, 8], strides = [1, 1]} : vector<16x8xi32> to vector<1x8xi32>
    %83 = vector.broadcast %82 : vector<1x8xi32> to vector<128x8xi32>
    %84 = arith.cmpi eq, %83, %2 : vector<128x8xi32>
    %85 = arith.extui %84 : vector<128x8xi1> to vector<128x8xi32>
    %86 = arith.sitofp %85 : vector<128x8xi32> to vector<128x8xf32>
    %87 = arith.addf %81, %86 : vector<128x8xf32>
    %88 = vector.extract_strided_slice %0 {offsets = [14, 0], sizes = [1, 8], strides = [1, 1]} : vector<16x8xi32> to vector<1x8xi32>
    %89 = vector.broadcast %88 : vector<1x8xi32> to vector<128x8xi32>
    %90 = arith.cmpi eq, %89, %2 : vector<128x8xi32>
    %91 = arith.extui %90 : vector<128x8xi1> to vector<128x8xi32>
    %92 = arith.sitofp %91 : vector<128x8xi32> to vector<128x8xf32>
    %93 = arith.addf %87, %92 : vector<128x8xf32>
    %94 = vector.extract_strided_slice %0 {offsets = [15, 0], sizes = [1, 8], strides = [1, 1]} : vector<16x8xi32> to vector<1x8xi32>
    %95 = vector.broadcast %94 : vector<1x8xi32> to vector<128x8xi32>
    %96 = arith.cmpi eq, %95, %2 : vector<128x8xi32>
    %97 = arith.extui %96 : vector<128x8xi1> to vector<128x8xi32>
    %98 = arith.sitofp %97 : vector<128x8xi32> to vector<128x8xf32>
    %99 = arith.addf %93, %98 : vector<128x8xf32>
    %100 = vector.broadcast %1 : vector<128x1xf32> to vector<128x8xf32>
    %101 = arith.mulf %99, %100 : vector<128x8xf32>
    %cst_3 = arith.constant dense<0.000000e+00> : vector<8xf32>
    %102 = vector.multi_reduction <add>, %101, %cst_3 [0] : vector<128x8xf32> to vector<8xf32>
    %103 = vector.shape_cast %102 : vector<8xf32> to vector<1x8xf32>
    %c0_4 = arith.constant 0 : index
    %c0_5 = arith.constant 0 : index
    %104 = vector.load %arg3[%c0_4, %c0_5] : memref<1x8xf32, #tpu.memory_space<vmem>>, vector<1x8xf32>
    tpu.vector_store %arg3[%c0_4, %c0_5], %103 {strides = array<i32>} : memref<1x8xf32, #tpu.memory_space<vmem>>, vector<1x8xf32>,
    return
  }
  func.func @transform_0(%arg0: i32) -> (i32, i32) {
    %c0_i32 = arith.constant 0 : i32
    %c0_i32_0 = arith.constant 0 : i32
    return %c0_i32, %arg0 : i32, i32
  }
  func.func @transform_1(%arg0: i32) -> (i32, i32) {
    %c0_i32 = arith.constant 0 : i32
    %c0_i32_0 = arith.constant 0 : i32
    %c0_i32_1 = arith.constant 0 : i32
    return %c0_i32, %c0_i32_0 : i32, i32
  }
  func.func @transform_2(%arg0: i32) -> (i32, i32) {
    %c0_i32 = arith.constant 0 : i32
    %c0_i32_0 = arith.constant 0 : i32
    return %c0_i32, %arg0 : i32, i32
  }
}

</mosaic_0001>

<llo_original>
// kernel: tpu_custom_call.1
$region0: #{tpu_custom_call.1}
  #allocation0 [shape = 'u32[]', space=smem, size = 0x4, offset = 0x4, fixed_abs, tag = 'smem constant byte address 0x4 - core index']
  #allocation1 [shape = 'u32[72,128]{1,0:T(1,128)}', space=vmem, size = 0x9000, scoped, tag = 'internal scratch']
  %s0 = inlined_call_operand.vmem [shape: s32[16,8], index: 0, kind: input, shape index: {}]
  %s1 = inlined_call_operand.vmem [shape: f32[128,1], index: 1, kind: input, shape index: {}]
  %s2 = inlined_call_operand.hbm [shape: f32[1,8], index: 2, kind: output, shape index: {}]
  %s3 = sld [smem:[#allocation0]]
  $region18: #{tpu_custom_call.1} parent=0
    _
  %s5 = ssub.s32 1, %s3
  %s6 = scalar_select 0, %s5, %s3
  $region1: #{tpu_custom_call.1} parent=0
    #allocation2 [shape = 'u8[512]{0}', space=vmem, size = 0x400, scoped, tag = 'output window, operand 0, single buffered']
    #allocation3 [shape = 's32[1]{0}', space=sflag, size = 0x4, scoped, tag = 'scoped memory for tpu_custom_call.1']
    %7 = vsyncpa [#allocation3], 0
    // Predicated region
    $region2: #{tpu_custom_call.1} parent=1 // pred_check
      _
    $region3: #{tpu_custom_call.1} parent=1 // pred_check_branch
      %9 = sbr.rel (0) target = $region5
    $region4: #{tpu_custom_call.1} parent=1 // pred_region
      _
    $region5: #{tpu_custom_call.1} parent=1 // pred_fallthru
      _
    // Predicated region
    $region6: #{tpu_custom_call.1} parent=1 // pred_check
      _
    $region7: #{tpu_custom_call.1} parent=1 // pred_check_branch
      %11 = sbr.rel (0) target = $region9
    $region8: #{tpu_custom_call.1} parent=1 // pred_region
      _
    $region9: #{tpu_custom_call.1} parent=1 // pred_fallthru
      _
    %v12 = vld [vmem:[%s0] sm:$0xff]
    %v13 = vld [vmem:[%s0 + $0x8] sm:$0xff]
    %v14 = vld [vmem:[%s1] sm:$0xff]
    %v15 = vld [vmem:[%s1 + $0x8] sm:$0xff]
    %v16 = vld [vmem:[%s1 + $0x10] sm:$0xff]
    %v17 = vld [vmem:[%s1 + $0x18] sm:$0xff]
    %v18 = vld [vmem:[%s1 + $0x20] sm:$0xff]
    %v19 = vld [vmem:[%s1 + $0x28] sm:$0xff]
    %v20 = vld [vmem:[%s1 + $0x30] sm:$0xff]
    %v21 = vld [vmem:[%s1 + $0x38] sm:$0xff]
    %v22 = vld [vmem:[%s1 + $0x40] sm:$0xff]
    %v23 = vld [vmem:[%s1 + $0x48] sm:$0xff]
    %v24 = vld [vmem:[%s1 + $0x50] sm:$0xff]
    %v25 = vld [vmem:[%s1 + $0x58] sm:$0xff]
    %v26 = vld [vmem:[%s1 + $0x60] sm:$0xff]
    %v27 = vld [vmem:[%s1 + $0x68] sm:$0xff]
    %v28 = vld [vmem:[%s1 + $0x70] sm:$0xff]
    %v29 = vld [vmem:[%s1 + $0x78] sm:$0xff]
    %v30 = vlaneseq
    %v31 = vshrl.u32 %v30, 7
    %v32 = vadd.s32 %v31, 8
    %v33 = vadd.s32 %v31, 16
    %v34 = vadd.s32 %v31, 24
    %v35 = vadd.s32 %v31, 32
    %v36 = vadd.s32 %v31, 40
    %v37 = vadd.s32 %v31, 48
    %v38 = vadd.s32 %v31, 56
    %v39 = vadd.s32 %v31, 64
    %v40 = vadd.s32 %v31, 72
    %v41 = vadd.s32 %v31, 80
    %v42 = vadd.s32 %v31, 88
    %v43 = vadd.s32 %v31, 96
    %v44 = vadd.s32 %v31, 104
    %v45 = vadd.s32 %v31, 112
    %v46 = vadd.s32 %v31, 120
    %v47 = vperm.slane %v12, 0
    %vm48 = vcmp.eq.s32.totalorder %v47, %v31
    %vm49 = vcmp.eq.s32.totalorder %v47, %v32
    %vm50 = vcmp.eq.s32.totalorder %v47, %v33
    %vm51 = vcmp.eq.s32.totalorder %v47, %v34
    %vm52 = vcmp.eq.s32.totalorder %v47, %v35
    %vm53 = vcmp.eq.s32.totalorder %v47, %v36
    %vm54 = vcmp.eq.s32.totalorder %v47, %v37
    %vm55 = vcmp.eq.s32.totalorder %v47, %v38
    %vm56 = vcmp.eq.s32.totalorder %v47, %v39
    %vm57 = vcmp.eq.s32.totalorder %v47, %v40
    %vm58 = vcmp.eq.s32.totalorder %v47, %v41
    %vm59 = vcmp.eq.s32.totalorder %v47, %v42
    %vm60 = vcmp.eq.s32.totalorder %v47, %v43
    %vm61 = vcmp.eq.s32.totalorder %v47, %v44
    %vm62 = vcmp.eq.s32.totalorder %v47, %v45
    %vm63 = vcmp.eq.s32.totalorder %v47, %v46
    %v64 = vsel %vm48, 1, 0
    %v65 = vsel %vm49, 1, 0
    %v66 = vsel %vm50, 1, 0
    %v67 = vsel %vm51, 1, 0
    %v68 = vsel %vm52, 1, 0
    %v69 = vsel %vm53, 1, 0
    %v70 = vsel %vm54, 1, 0
    %v71 = vsel %vm55, 1, 0
    %v72 = vsel %vm56, 1, 0
    %v73 = vsel %vm57, 1, 0
    %v74 = vsel %vm58, 1, 0
    %v75 = vsel %vm59, 1, 0
    %v76 = vsel %vm60, 1, 0
    %v77 = vsel %vm61, 1, 0
    %v78 = vsel %vm62, 1, 0
    %v79 = vsel %vm63, 1, 0
    %v80 = vcvt.s32.f32 %v64
    %v81 = vcvt.s32.f32 %v65
    %v82 = vcvt.s32.f32 %v66
    %v83 = vcvt.s32.f32 %v67
    %v84 = vcvt.s32.f32 %v68
    %v85 = vcvt.s32.f32 %v69
    %v86 = vcvt.s32.f32 %v70
    %v87 = vcvt.s32.f32 %v71
    %v88 = vcvt.s32.f32 %v72
    %v89 = vcvt.s32.f32 %v73
    %v90 = vcvt.s32.f32 %v74
    %v91 = vcvt.s32.f32 %v75
    %v92 = vcvt.s32.f32 %v76
    %v93 = vcvt.s32.f32 %v77
    %v94 = vcvt.s32.f32 %v78
    %v95 = vcvt.s32.f32 %v79
    %v96 = vadd.f32 %v80, 0.0
    %v97 = vadd.f32 %v81, 0.0
    %v98 = vadd.f32 %v82, 0.0
    %v99 = vadd.f32 %v83, 0.0
    %v100 = vadd.f32 %v84, 0.0
    %v101 = vadd.f32 %v85, 0.0
    %v102 = vadd.f32 %v86, 0.0
    %v103 = vadd.f32 %v87, 0.0
    %v104 = vadd.f32 %v88, 0.0
    %v105 = vadd.f32 %v89, 0.0
    %v106 = vadd.f32 %v90, 0.0
    %v107 = vadd.f32 %v91, 0.0
    %v108 = vadd.f32 %v92, 0.0
    %v109 = vadd.f32 %v93, 0.0
    %v110 = vadd.f32 %v94, 0.0
    %v111 = vadd.f32 %v95, 0.0
    %v112 = vperm.slane %v12, 1
    %vm113 = vcmp.eq.s32.totalorder %v112, %v31
    %vm114 = vcmp.eq.s32.totalorder %v112, %v32
    %vm115 = vcmp.eq.s32.totalorder %v112, %v33
    %vm116 = vcmp.eq.s32.totalorder %v112, %v34
    %vm117 = vcmp.eq.s32.totalorder %v112, %v35
    %vm118 = vcmp.eq.s32.totalorder %v112, %v36
    %vm119 = vcmp.eq.s32.totalorder %v112, %v37
    %vm120 = vcmp.eq.s32.totalorder %v112, %v38
    %vm121 = vcmp.eq.s32.totalorder %v112, %v39
    %vm122 = vcmp.eq.s32.totalorder %v112, %v40
    %vm123 = vcmp.eq.s32.totalorder %v112, %v41
    %vm124 = vcmp.eq.s32.totalorder %v112, %v42
    %vm125 = vcmp.eq.s32.totalorder %v112, %v43
    %vm126 = vcmp.eq.s32.totalorder %v112, %v44
    %vm127 = vcmp.eq.s32.totalorder %v112, %v45
    %vm128 = vcmp.eq.s32.totalorder %v112, %v46
    %v129 = vsel %vm113, 1, 0
    %v130 = vsel %vm114, 1, 0
    %v131 = vsel %vm115, 1, 0
    %v132 = vsel %vm116, 1, 0
    %v133 = vsel %vm117, 1, 0
    %v134 = vsel %vm118, 1, 0
    %v135 = vsel %vm119, 1, 0
    %v136 = vsel %vm120, 1, 0
    %v137 = vsel %vm121, 1, 0
    %v138 = vsel %vm122, 1, 0
    %v139 = vsel %vm123, 1, 0
    %v140 = vsel %vm124, 1, 0
    %v141 = vsel %vm125, 1, 0
    %v142 = vsel %vm126, 1, 0
    %v143 = vsel %vm127, 1, 0
    %v144 = vsel %vm128, 1, 0
    %v145 = vcvt.s32.f32 %v129
    %v146 = vcvt.s32.f32 %v130
    %v147 = vcvt.s32.f32 %v131
    %v148 = vcvt.s32.f32 %v132
    %v149 = vcvt.s32.f32 %v133
    %v150 = vcvt.s32.f32 %v134
    %v151 = vcvt.s32.f32 %v135
    %v152 = vcvt.s32.f32 %v136
    %v153 = vcvt.s32.f32 %v137
    %v154 = vcvt.s32.f32 %v138
    %v155 = vcvt.s32.f32 %v139
    %v156 = vcvt.s32.f32 %v140
    %v157 = vcvt.s32.f32 %v141
    %v158 = vcvt.s32.f32 %v142
    %v159 = vcvt.s32.f32 %v143
    %v160 = vcvt.s32.f32 %v144
    %v161 = vadd.f32 %v96, %v145
    %v162 = vadd.f32 %v97, %v146
    %v163 = vadd.f32 %v98, %v147
    %v164 = vadd.f32 %v99, %v148
    %v165 = vadd.f32 %v100, %v149
    %v166 = vadd.f32 %v101, %v150
    %v167 = vadd.f32 %v102, %v151
    %v168 = vadd.f32 %v103, %v152
    %v169 = vadd.f32 %v104, %v153
    %v170 = vadd.f32 %v105, %v154
    %v171 = vadd.f32 %v106, %v155
    %v172 = vadd.f32 %v107, %v156
    %v173 = vadd.f32 %v108, %v157
    %v174 = vadd.f32 %v109, %v158
    %v175 = vadd.f32 %v110, %v159
    %v176 = vadd.f32 %v111, %v160
    %v177 = vperm.slane %v12, 2
    %vm178 = vcmp.eq.s32.totalorder %v177, %v31
    %vm179 = vcmp.eq.s32.totalorder %v177, %v32
    %vm180 = vcmp.eq.s32.totalorder %v177, %v33
    %vm181 = vcmp.eq.s32.totalorder %v177, %v34
    %vm182 = vcmp.eq.s32.totalorder %v177, %v35
    %vm183 = vcmp.eq.s32.totalorder %v177, %v36
    %vm184 = vcmp.eq.s32.totalorder %v177, %v37
    %vm185 = vcmp.eq.s32.totalorder %v177, %v38
    %vm186 = vcmp.eq.s32.totalorder %v177, %v39
    %vm187 = vcmp.eq.s32.totalorder %v177, %v40
    %vm188 = vcmp.eq.s32.totalorder %v177, %v41
    %vm189 = vcmp.eq.s32.totalorder %v177, %v42
    %vm190 = vcmp.eq.s32.totalorder %v177, %v43
    %vm191 = vcmp.eq.s32.totalorder %v177, %v44
    %vm192 = vcmp.eq.s32.totalorder %v177, %v45
    %vm193 = vcmp.eq.s32.totalorder %v177, %v46
    %v194 = vsel %vm178, 1, 0
    %v195 = vsel %vm179, 1, 0
    %v196 = vsel %vm180, 1, 0
    %v197 = vsel %vm181, 1, 0
    %v198 = vsel %vm182, 1, 0
    %v199 = vsel %vm183, 1, 0
    %v200 = vsel %vm184, 1, 0
    %v201 = vsel %vm185, 1, 0
    %v202 = vsel %vm186, 1, 0
    %v203 = vsel %vm187, 1, 0
    %v204 = vsel %vm188, 1, 0
    %v205 = vsel %vm189, 1, 0
    %v206 = vsel %vm190, 1, 0
    %v207 = vsel %vm191, 1, 0
    %v208 = vsel %vm192, 1, 0
    %v209 = vsel %vm193, 1, 0
    %v210 = vcvt.s32.f32 %v194
    %v211 = vcvt.s32.f32 %v195
    %v212 = vcvt.s32.f32 %v196
    %v213 = vcvt.s32.f32 %v197
    %v214 = vcvt.s32.f32 %v198
    %v215 = vcvt.s32.f32 %v199
    %v216 = vcvt.s32.f32 %v200
    %v217 = vcvt.s32.f32 %v201
    %v218 = vcvt.s32.f32 %v202
    %v219 = vcvt.s32.f32 %v203
    %v220 = vcvt.s32.f32 %v204
    %v221 = vcvt.s32.f32 %v205
    %v222 = vcvt.s32.f32 %v206
    %v223 = vcvt.s32.f32 %v207
    %v224 = vcvt.s32.f32 %v208
    %v225 = vcvt.s32.f32 %v209
    %v226 = vadd.f32 %v161, %v210
    %v227 = vadd.f32 %v162, %v211
    %v228 = vadd.f32 %v163, %v212
    %v229 = vadd.f32 %v164, %v213
    %v230 = vadd.f32 %v165, %v214
    %v231 = vadd.f32 %v166, %v215
    %v232 = vadd.f32 %v167, %v216
    %v233 = vadd.f32 %v168, %v217
    %v234 = vadd.f32 %v169, %v218
    %v235 = vadd.f32 %v170, %v219
    %v236 = vadd.f32 %v171, %v220
    %v237 = vadd.f32 %v172, %v221
    %v238 = vadd.f32 %v173, %v222
    %v239 = vadd.f32 %v174, %v223
    %v240 = vadd.f32 %v175, %v224
    %v241 = vadd.f32 %v176, %v225
    %v242 = vperm.slane %v12, 3
    %vm243 = vcmp.eq.s32.totalorder %v242, %v31
    %vm244 = vcmp.eq.s32.totalorder %v242, %v32
    %vm245 = vcmp.eq.s32.totalorder %v242, %v33
    %vm246 = vcmp.eq.s32.totalorder %v242, %v34
    %vm247 = vcmp.eq.s32.totalorder %v242, %v35
    %vm248 = vcmp.eq.s32.totalorder %v242, %v36
    %vm249 = vcmp.eq.s32.totalorder %v242, %v37
    %vm250 = vcmp.eq.s32.totalorder %v242, %v38
    %vm251 = vcmp.eq.s32.totalorder %v242, %v39
    %vm252 = vcmp.eq.s32.totalorder %v242, %v40
    %vm253 = vcmp.eq.s32.totalorder %v242, %v41
    %vm254 = vcmp.eq.s32.totalorder %v242, %v42
    %vm255 = vcmp.eq.s32.totalorder %v242, %v43
    %vm256 = vcmp.eq.s32.totalorder %v242, %v44
    %vm257 = vcmp.eq.s32.totalorder %v242, %v45
    %vm258 = vcmp.eq.s32.totalorder %v242, %v46
    %v259 = vsel %vm243, 1, 0
    %v260 = vsel %vm244, 1, 0
    %v261 = vsel %vm245, 1, 0
    %v262 = vsel %vm246, 1, 0
    %v263 = vsel %vm247, 1, 0
    %v264 = vsel %vm248, 1, 0
    %v265 = vsel %vm249, 1, 0
    %v266 = vsel %vm250, 1, 0
    %v267 = vsel %vm251, 1, 0
    %v268 = vsel %vm252, 1, 0
    %v269 = vsel %vm253, 1, 0
    %v270 = vsel %vm254, 1, 0
    %v271 = vsel %vm255, 1, 0
    %v272 = vsel %vm256, 1, 0
    %v273 = vsel %vm257, 1, 0
    %v274 = vsel %vm258, 1, 0
    %v275 = vcvt.s32.f32 %v259
    %v276 = vcvt.s32.f32 %v260
    %v277 = vcvt.s32.f32 %v261
    %v278 = vcvt.s32.f32 %v262
    %v279 = vcvt.s32.f32 %v263
    %v280 = vcvt.s32.f32 %v264
    %v281 = vcvt.s32.f32 %v265
    %v282 = vcvt.s32.f32 %v266
    %v283 = vcvt.s32.f32 %v267
    %v284 = vcvt.s32.f32 %v268
    %v285 = vcvt.s32.f32 %v269
    %v286 = vcvt.s32.f32 %v270
    %v287 = vcvt.s32.f32 %v271
    %v288 = vcvt.s32.f32 %v272
    %v289 = vcvt.s32.f32 %v273
    %v290 = vcvt.s32.f32 %v274
    %v291 = vadd.f32 %v226, %v275
    %v292 = vadd.f32 %v227, %v276
    %v293 = vadd.f32 %v228, %v277
    %v294 = vadd.f32 %v229, %v278
    %v295 = vadd.f32 %v230, %v279
    %v296 = vadd.f32 %v231, %v280
    %v297 = vadd.f32 %v232, %v281
    %v298 = vadd.f32 %v233, %v282
    %v299 = vadd.f32 %v234, %v283
    %v300 = vadd.f32 %v235, %v284
    %v301 = vadd.f32 %v236, %v285
    %v302 = vadd.f32 %v237, %v286
    %v303 = vadd.f32 %v238, %v287
    %v304 = vadd.f32 %v239, %v288
    %v305 = vadd.f32 %v240, %v289
    %v306 = vadd.f32 %v241, %v290
    %v307 = vperm.slane %v12, 4
    %vm308 = vcmp.eq.s32.totalorder %v307, %v31
    %vm309 = vcmp.eq.s32.totalorder %v307, %v32
    %vm310 = vcmp.eq.s32.totalorder %v307, %v33
    %vm311 = vcmp.eq.s32.totalorder %v307, %v34
    %vm312 = vcmp.eq.s32.totalorder %v307, %v35
    %vm313 = vcmp.eq.s32.totalorder %v307, %v36
    %vm314 = vcmp.eq.s32.totalorder %v307, %v37
    %vm315 = vcmp.eq.s32.totalorder %v307, %v38
    %vm316 = vcmp.eq.s32.totalorder %v307, %v39
    %vm317 = vcmp.eq.s32.totalorder %v307, %v40
    %vm318 = vcmp.eq.s32.totalorder %v307, %v41
    %vm319 = vcmp.eq.s32.totalorder %v307, %v42
    %vm320 = vcmp.eq.s32.totalorder %v307, %v43
    %vm321 = vcmp.eq.s32.totalorder %v307, %v44
    %vm322 = vcmp.eq.s32.totalorder %v307, %v45
    %vm323 = vcmp.eq.s32.totalorder %v307, %v46
    %v324 = vsel %vm308, 1, 0
    %v325 = vsel %vm309, 1, 0
    %v326 = vsel %vm310, 1, 0
    %v327 = vsel %vm311, 1, 0
    %v328 = vsel %vm312, 1, 0
    %v329 = vsel %vm313, 1, 0
    %v330 = vsel %vm314, 1, 0
    %v331 = vsel %vm315, 1, 0
    %v332 = vsel %vm316, 1, 0
    %v333 = vsel %vm317, 1, 0
    %v334 = vsel %vm318, 1, 0
    %v335 = vsel %vm319, 1, 0
    %v336 = vsel %vm320, 1, 0
    %v337 = vsel %vm321, 1, 0
    %v338 = vsel %vm322, 1, 0
    %v339 = vsel %vm323, 1, 0
    %v340 = vcvt.s32.f32 %v324
    %v341 = vcvt.s32.f32 %v325
    %v342 = vcvt.s32.f32 %v326
    %v343 = vcvt.s32.f32 %v327
    %v344 = vcvt.s32.f32 %v328
    %v345 = vcvt.s32.f32 %v329
    %v346 = vcvt.s32.f32 %v330
    %v347 = vcvt.s32.f32 %v331
    %v348 = vcvt.s32.f32 %v332
    %v349 = vcvt.s32.f32 %v333
    %v350 = vcvt.s32.f32 %v334
    %v351 = vcvt.s32.f32 %v335
    %v352 = vcvt.s32.f32 %v336
    %v353 = vcvt.s32.f32 %v337
    %v354 = vcvt.s32.f32 %v338
    %v355 = vcvt.s32.f32 %v339
    %v356 = vadd.f32 %v291, %v340
    %v357 = vadd.f32 %v292, %v341
    %v358 = vadd.f32 %v293, %v342
    %v359 = vadd.f32 %v294, %v343
    %v360 = vadd.f32 %v295, %v344
    %v361 = vadd.f32 %v296, %v345
    %v362 = vadd.f32 %v297, %v346
    %v363 = vadd.f32 %v298, %v347
    %v364 = vadd.f32 %v299, %v348
    %v365 = vadd.f32 %v300, %v349
    %v366 = vadd.f32 %v301, %v350
    %v367 = vadd.f32 %v302, %v351
    %v368 = vadd.f32 %v303, %v352
    %v369 = vadd.f32 %v304, %v353
    %v370 = vadd.f32 %v305, %v354
    %v371 = vadd.f32 %v306, %v355
    %v372 = vperm.slane %v12, 5
    %vm373 = vcmp.eq.s32.totalorder %v372, %v31
    %vm374 = vcmp.eq.s32.totalorder %v372, %v32
    %vm375 = vcmp.eq.s32.totalorder %v372, %v33
    %vm376 = vcmp.eq.s32.totalorder %v372, %v34
    %vm377 = vcmp.eq.s32.totalorder %v372, %v35
    %vm378 = vcmp.eq.s32.totalorder %v372, %v36
    %vm379 = vcmp.eq.s32.totalorder %v372, %v37
    %vm380 = vcmp.eq.s32.totalorder %v372, %v38
    %vm381 = vcmp.eq.s32.totalorder %v372, %v39
    %vm382 = vcmp.eq.s32.totalorder %v372, %v40
    %vm383 = vcmp.eq.s32.totalorder %v372, %v41
    %vm384 = vcmp.eq.s32.totalorder %v372, %v42
    %vm385 = vcmp.eq.s32.totalorder %v372, %v43
    %vm386 = vcmp.eq.s32.totalorder %v372, %v44
    %vm387 = vcmp.eq.s32.totalorder %v372, %v45
    %vm388 = vcmp.eq.s32.totalorder %v372, %v46
    %v389 = vsel %vm373, 1, 0
    %v390 = vsel %vm374, 1, 0
    %v391 = vsel %vm375, 1, 0
    %v392 = vsel %vm376, 1, 0
    %v393 = vsel %vm377, 1, 0
    %v394 = vsel %vm378, 1, 0
    %v395 = vsel %vm379, 1, 0
    %v396 = vsel %vm380, 1, 0
    %v397 = vsel %vm381, 1, 0
    %v398 = vsel %vm382, 1, 0
    %v399 = vsel %vm383, 1, 0
    %v400 = vsel %vm384, 1, 0
    %v401 = vsel %vm385, 1, 0
    %v402 = vsel %vm386, 1, 0
    %v403 = vsel %vm387, 1, 0
    %v404 = vsel %vm388, 1, 0
    %v405 = vcvt.s32.f32 %v389
    %v406 = vcvt.s32.f32 %v390
    %v407 = vcvt.s32.f32 %v391
    %v408 = vcvt.s32.f32 %v392
    %v409 = vcvt.s32.f32 %v393
    %v410 = vcvt.s32.f32 %v394
    %v411 = vcvt.s32.f32 %v395
    %v412 = vcvt.s32.f32 %v396
    %v413 = vcvt.s32.f32 %v397
    %v414 = vcvt.s32.f32 %v398
    %v415 = vcvt.s32.f32 %v399
    %v416 = vcvt.s32.f32 %v400
    %v417 = vcvt.s32.f32 %v401
    %v418 = vcvt.s32.f32 %v402
    %v419 = vcvt.s32.f32 %v403
    %v420 = vcvt.s32.f32 %v404
    %v421 = vadd.f32 %v356, %v405
    %v422 = vadd.f32 %v357, %v406
    %v423 = vadd.f32 %v358, %v407
    %v424 = vadd.f32 %v359, %v408
    %v425 = vadd.f32 %v360, %v409
    %v426 = vadd.f32 %v361, %v410
    %v427 = vadd.f32 %v362, %v411
    %v428 = vadd.f32 %v363, %v412
    %v429 = vadd.f32 %v364, %v413
    %v430 = vadd.f32 %v365, %v414
    %v431 = vadd.f32 %v366, %v415
    %v432 = vadd.f32 %v367, %v416
    %v433 = vadd.f32 %v368, %v417
    %v434 = vadd.f32 %v369, %v418
    %v435 = vadd.f32 %v370, %v419
    %v436 = vadd.f32 %v371, %v420
    %v437 = vperm.slane %v12, 6
    %vm438 = vcmp.eq.s32.totalorder %v437, %v31
    %vm439 = vcmp.eq.s32.totalorder %v437, %v32
    %vm440 = vcmp.eq.s32.totalorder %v437, %v33
    %vm441 = vcmp.eq.s32.totalorder %v437, %v34
    %vm442 = vcmp.eq.s32.totalorder %v437, %v35
    %vm443 = vcmp.eq.s32.totalorder %v437, %v36
    %vm444 = vcmp.eq.s32.totalorder %v437, %v37
    %vm445 = vcmp.eq.s32.totalorder %v437, %v38
    %vm446 = vcmp.eq.s32.totalorder %v437, %v39
    %vm447 = vcmp.eq.s32.totalorder %v437, %v40
    %vm448 = vcmp.eq.s32.totalorder %v437, %v41
    %vm449 = vcmp.eq.s32.totalorder %v437, %v42
    %vm450 = vcmp.eq.s32.totalorder %v437, %v43
    %vm451 = vcmp.eq.s32.totalorder %v437, %v44
    %vm452 = vcmp.eq.s32.totalorder %v437, %v45
    %vm453 = vcmp.eq.s32.totalorder %v437, %v46
    %v454 = vsel %vm438, 1, 0
    %v455 = vsel %vm439, 1, 0
    %v456 = vsel %vm440, 1, 0
    %v457 = vsel %vm441, 1, 0
    %v458 = vsel %vm442, 1, 0
    %v459 = vsel %vm443, 1, 0
    %v460 = vsel %vm444, 1, 0
    %v461 = vsel %vm445, 1, 0
    %v462 = vsel %vm446, 1, 0
    %v463 = vsel %vm447, 1, 0
    %v464 = vsel %vm448, 1, 0
    %v465 = vsel %vm449, 1, 0
    %v466 = vsel %vm450, 1, 0
    %v467 = vsel %vm451, 1, 0
    %v468 = vsel %vm452, 1, 0
    %v469 = vsel %vm453, 1, 0
    %v470 = vcvt.s32.f32 %v454
    %v471 = vcvt.s32.f32 %v455
    %v472 = vcvt.s32.f32 %v456
    %v473 = vcvt.s32.f32 %v457
    %v474 = vcvt.s32.f32 %v458
    %v475 = vcvt.s32.f32 %v459
    %v476 = vcvt.s32.f32 %v460
    %v477 = vcvt.s32.f32 %v461
    %v478 = vcvt.s32.f32 %v462
    %v479 = vcvt.s32.f32 %v463
    %v480 = vcvt.s32.f32 %v464
    %v481 = vcvt.s32.f32 %v465
    %v482 = vcvt.s32.f32 %v466
    %v483 = vcvt.s32.f32 %v467
    %v484 = vcvt.s32.f32 %v468
    %v485 = vcvt.s32.f32 %v469
    %v486 = vadd.f32 %v421, %v470
    %v487 = vadd.f32 %v422, %v471
    %v488 = vadd.f32 %v423, %v472
    %v489 = vadd.f32 %v424, %v473
    %v490 = vadd.f32 %v425, %v474
    %v491 = vadd.f32 %v426, %v475
    %v492 = vadd.f32 %v427, %v476
    %v493 = vadd.f32 %v428, %v477
    %v494 = vadd.f32 %v429, %v478
    %v495 = vadd.f32 %v430, %v479
    %v496 = vadd.f32 %v431, %v480
    %v497 = vadd.f32 %v432, %v481
    %v498 = vadd.f32 %v433, %v482
    %v499 = vadd.f32 %v434, %v483
    %v500 = vadd.f32 %v435, %v484
    %v501 = vadd.f32 %v436, %v485
    %v502 = vperm.slane %v12, 7
    %vm503 = vcmp.eq.s32.totalorder %v502, %v31
    %vm504 = vcmp.eq.s32.totalorder %v502, %v32
    %vm505 = vcmp.eq.s32.totalorder %v502, %v33
    %vm506 = vcmp.eq.s32.totalorder %v502, %v34
    %vm507 = vcmp.eq.s32.totalorder %v502, %v35
    %vm508 = vcmp.eq.s32.totalorder %v502, %v36
    %vm509 = vcmp.eq.s32.totalorder %v502, %v37
    %vm510 = vcmp.eq.s32.totalorder %v502, %v38
    %vm511 = vcmp.eq.s32.totalorder %v502, %v39
    %vm512 = vcmp.eq.s32.totalorder %v502, %v40
    %vm513 = vcmp.eq.s32.totalorder %v502, %v41
    %vm514 = vcmp.eq.s32.totalorder %v502, %v42
    %vm515 = vcmp.eq.s32.totalorder %v502, %v43
    %vm516 = vcmp.eq.s32.totalorder %v502, %v44
    %vm517 = vcmp.eq.s32.totalorder %v502, %v45
    %vm518 = vcmp.eq.s32.totalorder %v502, %v46
    %v519 = vsel %vm503, 1, 0
    %v520 = vsel %vm504, 1, 0
    %v521 = vsel %vm505, 1, 0
    %v522 = vsel %vm506, 1, 0
    %v523 = vsel %vm507, 1, 0
    %v524 = vsel %vm508, 1, 0
    %v525 = vsel %vm509, 1, 0
    %v526 = vsel %vm510, 1, 0
    %v527 = vsel %vm511, 1, 0
    %v528 = vsel %vm512, 1, 0
    %v529 = vsel %vm513, 1, 0
    %v530 = vsel %vm514, 1, 0
    %v531 = vsel %vm515, 1, 0
    %v532 = vsel %vm516, 1, 0
    %v533 = vsel %vm517, 1, 0
    %v534 = vsel %vm518, 1, 0
    %v535 = vcvt.s32.f32 %v519
    %v536 = vcvt.s32.f32 %v520
    %v537 = vcvt.s32.f32 %v521
    %v538 = vcvt.s32.f32 %v522
    %v539 = vcvt.s32.f32 %v523
    %v540 = vcvt.s32.f32 %v524
    %v541 = vcvt.s32.f32 %v525
    %v542 = vcvt.s32.f32 %v526
    %v543 = vcvt.s32.f32 %v527
    %v544 = vcvt.s32.f32 %v528
    %v545 = vcvt.s32.f32 %v529
    %v546 = vcvt.s32.f32 %v530
    %v547 = vcvt.s32.f32 %v531
    %v548 = vcvt.s32.f32 %v532
    %v549 = vcvt.s32.f32 %v533
    %v550 = vcvt.s32.f32 %v534
    %v551 = vadd.f32 %v486, %v535
    %v552 = vadd.f32 %v487, %v536
    %v553 = vadd.f32 %v488, %v537
    %v554 = vadd.f32 %v489, %v538
    %v555 = vadd.f32 %v490, %v539
    %v556 = vadd.f32 %v491, %v540
    %v557 = vadd.f32 %v492, %v541
    %v558 = vadd.f32 %v493, %v542
    %v559 = vadd.f32 %v494, %v543
    %v560 = vadd.f32 %v495, %v544
    %v561 = vadd.f32 %v496, %v545
    %v562 = vadd.f32 %v497, %v546
    %v563 = vadd.f32 %v498, %v547
    %v564 = vadd.f32 %v499, %v548
    %v565 = vadd.f32 %v500, %v549
    %v566 = vadd.f32 %v501, %v550
    %v567 = vperm.slane %v13, 0
    %vm568 = vcmp.eq.s32.totalorder %v567, %v31
    %vm569 = vcmp.eq.s32.totalorder %v567, %v32
    %vm570 = vcmp.eq.s32.totalorder %v567, %v33
    %vm571 = vcmp.eq.s32.totalorder %v567, %v34
    %vm572 = vcmp.eq.s32.totalorder %v567, %v35
    %vm573 = vcmp.eq.s32.totalorder %v567, %v36
    %vm574 = vcmp.eq.s32.totalorder %v567, %v37
    %vm575 = vcmp.eq.s32.totalorder %v567, %v38
    %vm576 = vcmp.eq.s32.totalorder %v567, %v39
    %vm577 = vcmp.eq.s32.totalorder %v567, %v40
    %vm578 = vcmp.eq.s32.totalorder %v567, %v41
    %vm579 = vcmp.eq.s32.totalorder %v567, %v42
    %vm580 = vcmp.eq.s32.totalorder %v567, %v43
    %vm581 = vcmp.eq.s32.totalorder %v567, %v44
    %vm582 = vcmp.eq.s32.totalorder %v567, %v45
    %vm583 = vcmp.eq.s32.totalorder %v567, %v46
    %v584 = vsel %vm568, 1, 0
    %v585 = vsel %vm569, 1, 0
    %v586 = vsel %vm570, 1, 0
    %v587 = vsel %vm571, 1, 0
    %v588 = vsel %vm572, 1, 0
    %v589 = vsel %vm573, 1, 0
    %v590 = vsel %vm574, 1, 0
    %v591 = vsel %vm575, 1, 0
    %v592 = vsel %vm576, 1, 0
    %v593 = vsel %vm577, 1, 0
    %v594 = vsel %vm578, 1, 0
    %v595 = vsel %vm579, 1, 0
    %v596 = vsel %vm580, 1, 0
    %v597 = vsel %vm581, 1, 0
    %v598 = vsel %vm582, 1, 0
    %v599 = vsel %vm583, 1, 0
    %v600 = vcvt.s32.f32 %v584
    %v601 = vcvt.s32.f32 %v585
    %v602 = vcvt.s32.f32 %v586
    %v603 = vcvt.s32.f32 %v587
    %v604 = vcvt.s32.f32 %v588
    %v605 = vcvt.s32.f32 %v589
    %v606 = vcvt.s32.f32 %v590
    %v607 = vcvt.s32.f32 %v591
    %v608 = vcvt.s32.f32 %v592
    %v609 = vcvt.s32.f32 %v593
    %v610 = vcvt.s32.f32 %v594
    %v611 = vcvt.s32.f32 %v595
    %v612 = vcvt.s32.f32 %v596
    %v613 = vcvt.s32.f32 %v597
    %v614 = vcvt.s32.f32 %v598
    %v615 = vcvt.s32.f32 %v599
    %v616 = vadd.f32 %v551, %v600
    %v617 = vadd.f32 %v552, %v601
    %v618 = vadd.f32 %v553, %v602
    %v619 = vadd.f32 %v554, %v603
    %v620 = vadd.f32 %v555, %v604
    %v621 = vadd.f32 %v556, %v605
    %v622 = vadd.f32 %v557, %v606
    %v623 = vadd.f32 %v558, %v607
    %v624 = vadd.f32 %v559, %v608
    %v625 = vadd.f32 %v560, %v609
    %v626 = vadd.f32 %v561, %v610
    %v627 = vadd.f32 %v562, %v611
    %v628 = vadd.f32 %v563, %v612
    %v629 = vadd.f32 %v564, %v613
    %v630 = vadd.f32 %v565, %v614
    %v631 = vadd.f32 %v566, %v615
    %v632 = vperm.slane %v13, 1
    %vm633 = vcmp.eq.s32.totalorder %v632, %v31
    %vm634 = vcmp.eq.s32.totalorder %v632, %v32
    %vm635 = vcmp.eq.s32.totalorder %v632, %v33
    %vm636 = vcmp.eq.s32.totalorder %v632, %v34
    %vm637 = vcmp.eq.s32.totalorder %v632, %v35
    %vm638 = vcmp.eq.s32.totalorder %v632, %v36
    %vm639 = vcmp.eq.s32.totalorder %v632, %v37
    %vm640 = vcmp.eq.s32.totalorder %v632, %v38
    %vm641 = vcmp.eq.s32.totalorder %v632, %v39
    %vm642 = vcmp.eq.s32.totalorder %v632, %v40
    %vm643 = vcmp.eq.s32.totalorder %v632, %v41
    %vm644 = vcmp.eq.s32.totalorder %v632, %v42
    %vm645 = vcmp.eq.s32.totalorder %v632, %v43
    %vm646 = vcmp.eq.s32.totalorder %v632, %v44
    %vm647 = vcmp.eq.s32.totalorder %v632, %v45
    %vm648 = vcmp.eq.s32.totalorder %v632, %v46
    %v649 = vsel %vm633, 1, 0
    %v650 = vsel %vm634, 1, 0
    %v651 = vsel %vm635, 1, 0
    %v652 = vsel %vm636, 1, 0
    %v653 = vsel %vm637, 1, 0
    %v654 = vsel %vm638, 1, 0
    %v655 = vsel %vm639, 1, 0
    %v656 = vsel %vm640, 1, 0
    %v657 = vsel %vm641, 1, 0
    %v658 = vsel %vm642, 1, 0
    %v659 = vsel %vm643, 1, 0
    %v660 = vsel %vm644, 1, 0
    %v661 = vsel %vm645, 1, 0
    %v662 = vsel %vm646, 1, 0
    %v663 = vsel %vm647, 1, 0
    %v664 = vsel %vm648, 1, 0
    %v665 = vcvt.s32.f32 %v649
    %v666 = vcvt.s32.f32 %v650
    %v667 = vcvt.s32.f32 %v651
    %v668 = vcvt.s32.f32 %v652
    %v669 = vcvt.s32.f32 %v653
    %v670 = vcvt.s32.f32 %v654
    %v671 = vcvt.s32.f32 %v655
    %v672 = vcvt.s32.f32 %v656
    %v673 = vcvt.s32.f32 %v657
    %v674 = vcvt.s32.f32 %v658
    %v675 = vcvt.s32.f32 %v659
    %v676 = vcvt.s32.f32 %v660
    %v677 = vcvt.s32.f32 %v661
    %v678 = vcvt.s32.f32 %v662
    %v679 = vcvt.s32.f32 %v663
    %v680 = vcvt.s32.f32 %v664
    %v681 = vadd.f32 %v616, %v665
    %v682 = vadd.f32 %v617, %v666
    %v683 = vadd.f32 %v618, %v667
    %v684 = vadd.f32 %v619, %v668
    %v685 = vadd.f32 %v620, %v669
    %v686 = vadd.f32 %v621, %v670
    %v687 = vadd.f32 %v622, %v671
    %v688 = vadd.f32 %v623, %v672
    %v689 = vadd.f32 %v624, %v673
    %v690 = vadd.f32 %v625, %v674
    %v691 = vadd.f32 %v626, %v675
    %v692 = vadd.f32 %v627, %v676
    %v693 = vadd.f32 %v628, %v677
    %v694 = vadd.f32 %v629, %v678
    %v695 = vadd.f32 %v630, %v679
    %v696 = vadd.f32 %v631, %v680
    %v697 = vperm.slane %v13, 2
    %vm698 = vcmp.eq.s32.totalorder %v697, %v31
    %vm699 = vcmp.eq.s32.totalorder %v697, %v32
    %vm700 = vcmp.eq.s32.totalorder %v697, %v33
    %vm701 = vcmp.eq.s32.totalorder %v697, %v34
    %vm702 = vcmp.eq.s32.totalorder %v697, %v35
    %vm703 = vcmp.eq.s32.totalorder %v697, %v36
    %vm704 = vcmp.eq.s32.totalorder %v697, %v37
    %vm705 = vcmp.eq.s32.totalorder %v697, %v38
    %vm706 = vcmp.eq.s32.totalorder %v697, %v39
    %vm707 = vcmp.eq.s32.totalorder %v697, %v40
    %vm708 = vcmp.eq.s32.totalorder %v697, %v41
    %vm709 = vcmp.eq.s32.totalorder %v697, %v42
    %vm710 = vcmp.eq.s32.totalorder %v697, %v43
    %vm711 = vcmp.eq.s32.totalorder %v697, %v44
    %vm712 = vcmp.eq.s32.totalorder %v697, %v45
    %vm713 = vcmp.eq.s32.totalorder %v697, %v46
    %v714 = vsel %vm698, 1, 0
    %v715 = vsel %vm699, 1, 0
    %v716 = vsel %vm700, 1, 0
    %v717 = vsel %vm701, 1, 0
    %v718 = vsel %vm702, 1, 0
    %v719 = vsel %vm703, 1, 0
    %v720 = vsel %vm704, 1, 0
    %v721 = vsel %vm705, 1, 0
    %v722 = vsel %vm706, 1, 0
    %v723 = vsel %vm707, 1, 0
    %v724 = vsel %vm708, 1, 0
    %v725 = vsel %vm709, 1, 0
    %v726 = vsel %vm710, 1, 0
    %v727 = vsel %vm711, 1, 0
    %v728 = vsel %vm712, 1, 0
    %v729 = vsel %vm713, 1, 0
    %v730 = vcvt.s32.f32 %v714
    %v731 = vcvt.s32.f32 %v715
    %v732 = vcvt.s32.f32 %v716
    %v733 = vcvt.s32.f32 %v717
    %v734 = vcvt.s32.f32 %v718
    %v735 = vcvt.s32.f32 %v719
    %v736 = vcvt.s32.f32 %v720
    %v737 = vcvt.s32.f32 %v721
    %v738 = vcvt.s32.f32 %v722
    %v739 = vcvt.s32.f32 %v723
    %v740 = vcvt.s32.f32 %v724
    %v741 = vcvt.s32.f32 %v725
    %v742 = vcvt.s32.f32 %v726
    %v743 = vcvt.s32.f32 %v727
    %v744 = vcvt.s32.f32 %v728
    %v745 = vcvt.s32.f32 %v729
    %v746 = vadd.f32 %v681, %v730
    %v747 = vadd.f32 %v682, %v731
    %v748 = vadd.f32 %v683, %v732
    %v749 = vadd.f32 %v684, %v733
    %v750 = vadd.f32 %v685, %v734
    %v751 = vadd.f32 %v686, %v735
    %v752 = vadd.f32 %v687, %v736
    %v753 = vadd.f32 %v688, %v737
    %v754 = vadd.f32 %v689, %v738
    %v755 = vadd.f32 %v690, %v739
    %v756 = vadd.f32 %v691, %v740
    %v757 = vadd.f32 %v692, %v741
    %v758 = vadd.f32 %v693, %v742
    %v759 = vadd.f32 %v694, %v743
    %v760 = vadd.f32 %v695, %v744
    %v761 = vadd.f32 %v696, %v745
    %v762 = vperm.slane %v13, 3
    %vm763 = vcmp.eq.s32.totalorder %v762, %v31
    %vm764 = vcmp.eq.s32.totalorder %v762, %v32
    %vm765 = vcmp.eq.s32.totalorder %v762, %v33
    %vm766 = vcmp.eq.s32.totalorder %v762, %v34
    %vm767 = vcmp.eq.s32.totalorder %v762, %v35
    %vm768 = vcmp.eq.s32.totalorder %v762, %v36
    %vm769 = vcmp.eq.s32.totalorder %v762, %v37
    %vm770 = vcmp.eq.s32.totalorder %v762, %v38
    %vm771 = vcmp.eq.s32.totalorder %v762, %v39
    %vm772 = vcmp.eq.s32.totalorder %v762, %v40
    %vm773 = vcmp.eq.s32.totalorder %v762, %v41
    %vm774 = vcmp.eq.s32.totalorder %v762, %v42
    %vm775 = vcmp.eq.s32.totalorder %v762, %v43
    %vm776 = vcmp.eq.s32.totalorder %v762, %v44
    %vm777 = vcmp.eq.s32.totalorder %v762, %v45
    %vm778 = vcmp.eq.s32.totalorder %v762, %v46
    %v779 = vsel %vm763, 1, 0
    %v780 = vsel %vm764, 1, 0
    %v781 = vsel %vm765, 1, 0
    %v782 = vsel %vm766, 1, 0
    %v783 = vsel %vm767, 1, 0
    %v784 = vsel %vm768, 1, 0
    %v785 = vsel %vm769, 1, 0
    %v786 = vsel %vm770, 1, 0
    %v787 = vsel %vm771, 1, 0
    %v788 = vsel %vm772, 1, 0
    %v789 = vsel %vm773, 1, 0
    %v790 = vsel %vm774, 1, 0
    %v791 = vsel %vm775, 1, 0
    %v792 = vsel %vm776, 1, 0
    %v793 = vsel %vm777, 1, 0
    %v794 = vsel %vm778, 1, 0
    %v795 = vcvt.s32.f32 %v779
    %v796 = vcvt.s32.f32 %v780
    %v797 = vcvt.s32.f32 %v781
    %v798 = vcvt.s32.f32 %v782
    %v799 = vcvt.s32.f32 %v783
    %v800 = vcvt.s32.f32 %v784
    %v801 = vcvt.s32.f32 %v785
    %v802 = vcvt.s32.f32 %v786
    %v803 = vcvt.s32.f32 %v787
    %v804 = vcvt.s32.f32 %v788
    %v805 = vcvt.s32.f32 %v789
    %v806 = vcvt.s32.f32 %v790
    %v807 = vcvt.s32.f32 %v791
    %v808 = vcvt.s32.f32 %v792
    %v809 = vcvt.s32.f32 %v793
    %v810 = vcvt.s32.f32 %v794
    %v811 = vadd.f32 %v746, %v795
    %v812 = vadd.f32 %v747, %v796
    %v813 = vadd.f32 %v748, %v797
    %v814 = vadd.f32 %v749, %v798
    %v815 = vadd.f32 %v750, %v799
    %v816 = vadd.f32 %v751, %v800
    %v817 = vadd.f32 %v752, %v801
    %v818 = vadd.f32 %v753, %v802
    %v819 = vadd.f32 %v754, %v803
    %v820 = vadd.f32 %v755, %v804
    %v821 = vadd.f32 %v756, %v805
    %v822 = vadd.f32 %v757, %v806
    %v823 = vadd.f32 %v758, %v807
    %v824 = vadd.f32 %v759, %v808
    %v825 = vadd.f32 %v760, %v809
    %v826 = vadd.f32 %v761, %v810
    %v827 = vperm.slane %v13, 4
    %vm828 = vcmp.eq.s32.totalorder %v827, %v31
    %vm829 = vcmp.eq.s32.totalorder %v827, %v32
    %vm830 = vcmp.eq.s32.totalorder %v827, %v33
    %vm831 = vcmp.eq.s32.totalorder %v827, %v34
    %vm832 = vcmp.eq.s32.totalorder %v827, %v35
    %vm833 = vcmp.eq.s32.totalorder %v827, %v36
    %vm834 = vcmp.eq.s32.totalorder %v827, %v37
    %vm835 = vcmp.eq.s32.totalorder %v827, %v38
    %vm836 = vcmp.eq.s32.totalorder %v827, %v39
    %vm837 = vcmp.eq.s32.totalorder %v827, %v40
    %vm838 = vcmp.eq.s32.totalorder %v827, %v41
    %vm839 = vcmp.eq.s32.totalorder %v827, %v42
    %vm840 = vcmp.eq.s32.totalorder %v827, %v43
    %vm841 = vcmp.eq.s32.totalorder %v827, %v44
    %vm842 = vcmp.eq.s32.totalorder %v827, %v45
    %vm843 = vcmp.eq.s32.totalorder %v827, %v46
    %v844 = vsel %vm828, 1, 0
    %v845 = vsel %vm829, 1, 0
    %v846 = vsel %vm830, 1, 0
    %v847 = vsel %vm831, 1, 0
    %v848 = vsel %vm832, 1, 0
    %v849 = vsel %vm833, 1, 0
    %v850 = vsel %vm834, 1, 0
    %v851 = vsel %vm835, 1, 0
    %v852 = vsel %vm836, 1, 0
    %v853 = vsel %vm837, 1, 0
    %v854 = vsel %vm838, 1, 0
    %v855 = vsel %vm839, 1, 0
    %v856 = vsel %vm840, 1, 0
    %v857 = vsel %vm841, 1, 0
    %v858 = vsel %vm842, 1, 0
    %v859 = vsel %vm843, 1, 0
    %v860 = vcvt.s32.f32 %v844
    %v861 = vcvt.s32.f32 %v845
    %v862 = vcvt.s32.f32 %v846
    %v863 = vcvt.s32.f32 %v847
    %v864 = vcvt.s32.f32 %v848
    %v865 = vcvt.s32.f32 %v849
    %v866 = vcvt.s32.f32 %v850
    %v867 = vcvt.s32.f32 %v851
    %v868 = vcvt.s32.f32 %v852
    %v869 = vcvt.s32.f32 %v853
    %v870 = vcvt.s32.f32 %v854
    %v871 = vcvt.s32.f32 %v855
    %v872 = vcvt.s32.f32 %v856
    %v873 = vcvt.s32.f32 %v857
    %v874 = vcvt.s32.f32 %v858
    %v875 = vcvt.s32.f32 %v859
    %v876 = vadd.f32 %v811, %v860
    %v877 = vadd.f32 %v812, %v861
    %v878 = vadd.f32 %v813, %v862
    %v879 = vadd.f32 %v814, %v863
    %v880 = vadd.f32 %v815, %v864
    %v881 = vadd.f32 %v816, %v865
    %v882 = vadd.f32 %v817, %v866
    %v883 = vadd.f32 %v818, %v867
    %v884 = vadd.f32 %v819, %v868
    %v885 = vadd.f32 %v820, %v869
    %v886 = vadd.f32 %v821, %v870
    %v887 = vadd.f32 %v822, %v871
    %v888 = vadd.f32 %v823, %v872
    %v889 = vadd.f32 %v824, %v873
    %v890 = vadd.f32 %v825, %v874
    %v891 = vadd.f32 %v826, %v875
    %v892 = vperm.slane %v13, 5
    %vm893 = vcmp.eq.s32.totalorder %v892, %v31
    %vm894 = vcmp.eq.s32.totalorder %v892, %v32
    %vm895 = vcmp.eq.s32.totalorder %v892, %v33
    %vm896 = vcmp.eq.s32.totalorder %v892, %v34
    %vm897 = vcmp.eq.s32.totalorder %v892, %v35
    %vm898 = vcmp.eq.s32.totalorder %v892, %v36
    %vm899 = vcmp.eq.s32.totalorder %v892, %v37
    %vm900 = vcmp.eq.s32.totalorder %v892, %v38
    %vm901 = vcmp.eq.s32.totalorder %v892, %v39
    %vm902 = vcmp.eq.s32.totalorder %v892, %v40
    %vm903 = vcmp.eq.s32.totalorder %v892, %v41
    %vm904 = vcmp.eq.s32.totalorder %v892, %v42
    %vm905 = vcmp.eq.s32.totalorder %v892, %v43
    %vm906 = vcmp.eq.s32.totalorder %v892, %v44
    %vm907 = vcmp.eq.s32.totalorder %v892, %v45
    %vm908 = vcmp.eq.s32.totalorder %v892, %v46
    %v909 = vsel %vm893, 1, 0
    %v910 = vsel %vm894, 1, 0
    %v911 = vsel %vm895, 1, 0
    %v912 = vsel %vm896, 1, 0
    %v913 = vsel %vm897, 1, 0
    %v914 = vsel %vm898, 1, 0
    %v915 = vsel %vm899, 1, 0
    %v916 = vsel %vm900, 1, 0
    %v917 = vsel %vm901, 1, 0
    %v918 = vsel %vm902, 1, 0
    %v919 = vsel %vm903, 1, 0
    %v920 = vsel %vm904, 1, 0
    %v921 = vsel %vm905, 1, 0
    %v922 = vsel %vm906, 1, 0
    %v923 = vsel %vm907, 1, 0
    %v924 = vsel %vm908, 1, 0
    %v925 = vcvt.s32.f32 %v909
    %v926 = vcvt.s32.f32 %v910
    %v927 = vcvt.s32.f32 %v911
    %v928 = vcvt.s32.f32 %v912
    %v929 = vcvt.s32.f32 %v913
    %v930 = vcvt.s32.f32 %v914
    %v931 = vcvt.s32.f32 %v915
    %v932 = vcvt.s32.f32 %v916
    %v933 = vcvt.s32.f32 %v917
    %v934 = vcvt.s32.f32 %v918
    %v935 = vcvt.s32.f32 %v919
    %v936 = vcvt.s32.f32 %v920
    %v937 = vcvt.s32.f32 %v921
    %v938 = vcvt.s32.f32 %v922
    %v939 = vcvt.s32.f32 %v923
    %v940 = vcvt.s32.f32 %v924
    %v941 = vadd.f32 %v876, %v925
    %v942 = vadd.f32 %v877, %v926
    %v943 = vadd.f32 %v878, %v927
    %v944 = vadd.f32 %v879, %v928
    %v945 = vadd.f32 %v880, %v929
    %v946 = vadd.f32 %v881, %v930
    %v947 = vadd.f32 %v882, %v931
    %v948 = vadd.f32 %v883, %v932
    %v949 = vadd.f32 %v884, %v933
    %v950 = vadd.f32 %v885, %v934
    %v951 = vadd.f32 %v886, %v935
    %v952 = vadd.f32 %v887, %v936
    %v953 = vadd.f32 %v888, %v937
    %v954 = vadd.f32 %v889, %v938
    %v955 = vadd.f32 %v890, %v939
    %v956 = vadd.f32 %v891, %v940
    %v957 = vperm.slane %v13, 6
    %vm958 = vcmp.eq.s32.totalorder %v957, %v31
    %vm959 = vcmp.eq.s32.totalorder %v957, %v32
    %vm960 = vcmp.eq.s32.totalorder %v957, %v33
    %vm961 = vcmp.eq.s32.totalorder %v957, %v34
    %vm962 = vcmp.eq.s32.totalorder %v957, %v35
    %vm963 = vcmp.eq.s32.totalorder %v957, %v36
    %vm964 = vcmp.eq.s32.totalorder %v957, %v37
    %vm965 = vcmp.eq.s32.totalorder %v957, %v38
    %vm966 = vcmp.eq.s32.totalorder %v957, %v39
    %vm967 = vcmp.eq.s32.totalorder %v957, %v40
    %vm968 = vcmp.eq.s32.totalorder %v957, %v41
    %vm969 = vcmp.eq.s32.totalorder %v957, %v42
    %vm970 = vcmp.eq.s32.totalorder %v957, %v43
    %vm971 = vcmp.eq.s32.totalorder %v957, %v44
    %vm972 = vcmp.eq.s32.totalorder %v957, %v45
    %vm973 = vcmp.eq.s32.totalorder %v957, %v46
    %v974 = vsel %vm958, 1, 0
    %v975 = vsel %vm959, 1, 0
    %v976 = vsel %vm960, 1, 0
    %v977 = vsel %vm961, 1, 0
    %v978 = vsel %vm962, 1, 0
    %v979 = vsel %vm963, 1, 0
    %v980 = vsel %vm964, 1, 0
    %v981 = vsel %vm965, 1, 0
    %v982 = vsel %vm966, 1, 0
    %v983 = vsel %vm967, 1, 0
    %v984 = vsel %vm968, 1, 0
    %v985 = vsel %vm969, 1, 0
    %v986 = vsel %vm970, 1, 0
    %v987 = vsel %vm971, 1, 0
    %v988 = vsel %vm972, 1, 0
    %v989 = vsel %vm973, 1, 0
    %v990 = vcvt.s32.f32 %v974
    %v991 = vcvt.s32.f32 %v975
    %v992 = vcvt.s32.f32 %v976
    %v993 = vcvt.s32.f32 %v977
    %v994 = vcvt.s32.f32 %v978
    %v995 = vcvt.s32.f32 %v979
    %v996 = vcvt.s32.f32 %v980
    %v997 = vcvt.s32.f32 %v981
    %v998 = vcvt.s32.f32 %v982
    %v999 = vcvt.s32.f32 %v983
    %v1000 = vcvt.s32.f32 %v984
    %v1001 = vcvt.s32.f32 %v985
    %v1002 = vcvt.s32.f32 %v986
    %v1003 = vcvt.s32.f32 %v987
    %v1004 = vcvt.s32.f32 %v988
    %v1005 = vcvt.s32.f32 %v989
    %v1006 = vadd.f32 %v941, %v990
    %v1007 = vadd.f32 %v942, %v991
    %v1008 = vadd.f32 %v943, %v992
    %v1009 = vadd.f32 %v944, %v993
    %v1010 = vadd.f32 %v945, %v994
    %v1011 = vadd.f32 %v946, %v995
    %v1012 = vadd.f32 %v947, %v996
    %v1013 = vadd.f32 %v948, %v997
    %v1014 = vadd.f32 %v949, %v998
    %v1015 = vadd.f32 %v950, %v999
    %v1016 = vadd.f32 %v951, %v1000
    %v1017 = vadd.f32 %v952, %v1001
    %v1018 = vadd.f32 %v953, %v1002
    %v1019 = vadd.f32 %v954, %v1003
    %v1020 = vadd.f32 %v955, %v1004
    %v1021 = vadd.f32 %v956, %v1005
    %v1022 = vperm.slane %v13, 7
    %vm1023 = vcmp.eq.s32.totalorder %v1022, %v31
    %vm1024 = vcmp.eq.s32.totalorder %v1022, %v32
    %vm1025 = vcmp.eq.s32.totalorder %v1022, %v33
    %vm1026 = vcmp.eq.s32.totalorder %v1022, %v34
    %vm1027 = vcmp.eq.s32.totalorder %v1022, %v35
    %vm1028 = vcmp.eq.s32.totalorder %v1022, %v36
    %vm1029 = vcmp.eq.s32.totalorder %v1022, %v37
    %vm1030 = vcmp.eq.s32.totalorder %v1022, %v38
    %vm1031 = vcmp.eq.s32.totalorder %v1022, %v39
    %vm1032 = vcmp.eq.s32.totalorder %v1022, %v40
    %vm1033 = vcmp.eq.s32.totalorder %v1022, %v41
    %vm1034 = vcmp.eq.s32.totalorder %v1022, %v42
    %vm1035 = vcmp.eq.s32.totalorder %v1022, %v43
    %vm1036 = vcmp.eq.s32.totalorder %v1022, %v44
    %vm1037 = vcmp.eq.s32.totalorder %v1022, %v45
    %vm1038 = vcmp.eq.s32.totalorder %v1022, %v46
    %v1039 = vsel %vm1023, 1, 0
    %v1040 = vsel %vm1024, 1, 0
    %v1041 = vsel %vm1025, 1, 0
    %v1042 = vsel %vm1026, 1, 0
    %v1043 = vsel %vm1027, 1, 0
    %v1044 = vsel %vm1028, 1, 0
    %v1045 = vsel %vm1029, 1, 0
    %v1046 = vsel %vm1030, 1, 0
    %v1047 = vsel %vm1031, 1, 0
    %v1048 = vsel %vm1032, 1, 0
    %v1049 = vsel %vm1033, 1, 0
    %v1050 = vsel %vm1034, 1, 0
    %v1051 = vsel %vm1035, 1, 0
    %v1052 = vsel %vm1036, 1, 0
    %v1053 = vsel %vm1037, 1, 0
    %v1054 = vsel %vm1038, 1, 0
    %v1055 = vcvt.s32.f32 %v1039
    %v1056 = vcvt.s32.f32 %v1040
    %v1057 = vcvt.s32.f32 %v1041
    %v1058 = vcvt.s32.f32 %v1042
    %v1059 = vcvt.s32.f32 %v1043
    %v1060 = vcvt.s32.f32 %v1044
    %v1061 = vcvt.s32.f32 %v1045
    %v1062 = vcvt.s32.f32 %v1046
    %v1063 = vcvt.s32.f32 %v1047
    %v1064 = vcvt.s32.f32 %v1048
    %v1065 = vcvt.s32.f32 %v1049
    %v1066 = vcvt.s32.f32 %v1050
    %v1067 = vcvt.s32.f32 %v1051
    %v1068 = vcvt.s32.f32 %v1052
    %v1069 = vcvt.s32.f32 %v1053
    %v1070 = vcvt.s32.f32 %v1054
    %v1071 = vadd.f32 %v1006, %v1055
    %v1072 = vadd.f32 %v1007, %v1056
    %v1073 = vadd.f32 %v1008, %v1057
    %v1074 = vadd.f32 %v1009, %v1058
    %v1075 = vadd.f32 %v1010, %v1059
    %v1076 = vadd.f32 %v1011, %v1060
    %v1077 = vadd.f32 %v1012, %v1061
    %v1078 = vadd.f32 %v1013, %v1062
    %v1079 = vadd.f32 %v1014, %v1063
    %v1080 = vadd.f32 %v1015, %v1064
    %v1081 = vadd.f32 %v1016, %v1065
    %v1082 = vadd.f32 %v1017, %v1066
    %v1083 = vadd.f32 %v1018, %v1067
    %v1084 = vadd.f32 %v1019, %v1068
    %v1085 = vadd.f32 %v1020, %v1069
    %v1086 = vadd.f32 %v1021, %v1070
    %1088 = vset.pattern.permute.xlu0 0
    %1089 = vperm.xlu0 %1088, %v14
    %v1090 = vpop.permute.xlu0 %1089
    %1093 = vset.pattern.permute.xlu0 0
    %1094 = vperm.xlu0 %1093, %v15
    %v1095 = vpop.permute.xlu0 %1094
    %1098 = vset.pattern.permute.xlu0 0
    %1099 = vperm.xlu0 %1098, %v16
    %v1100 = vpop.permute.xlu0 %1099
    %1103 = vset.pattern.permute.xlu0 0
    %1104 = vperm.xlu0 %1103, %v17
    %v1105 = vpop.permute.xlu0 %1104
    %1108 = vset.pattern.permute.xlu0 0
    %1109 = vperm.xlu0 %1108, %v18
    %v1110 = vpop.permute.xlu0 %1109
    %1113 = vset.pattern.permute.xlu0 0
    %1114 = vperm.xlu0 %1113, %v19
    %v1115 = vpop.permute.xlu0 %1114
    %1118 = vset.pattern.permute.xlu0 0
    %1119 = vperm.xlu0 %1118, %v20
    %v1120 = vpop.permute.xlu0 %1119
    %1123 = vset.pattern.permute.xlu0 0
    %1124 = vperm.xlu0 %1123, %v21
    %v1125 = vpop.permute.xlu0 %1124
    %1128 = vset.pattern.permute.xlu0 0
    %1129 = vperm.xlu0 %1128, %v22
    %v1130 = vpop.permute.xlu0 %1129
    %1133 = vset.pattern.permute.xlu0 0
    %1134 = vperm.xlu0 %1133, %v23
    %v1135 = vpop.permute.xlu0 %1134
    %1138 = vset.pattern.permute.xlu0 0
    %1139 = vperm.xlu0 %1138, %v24
    %v1140 = vpop.permute.xlu0 %1139
    %1143 = vset.pattern.permute.xlu0 0
    %1144 = vperm.xlu0 %1143, %v25
    %v1145 = vpop.permute.xlu0 %1144
    %1148 = vset.pattern.permute.xlu0 0
    %1149 = vperm.xlu0 %1148, %v26
    %v1150 = vpop.permute.xlu0 %1149
    %1153 = vset.pattern.permute.xlu0 0
    %1154 = vperm.xlu0 %1153, %v27
    %v1155 = vpop.permute.xlu0 %1154
    %1158 = vset.pattern.permute.xlu0 0
    %1159 = vperm.xlu0 %1158, %v28
    %v1160 = vpop.permute.xlu0 %1159
    %1163 = vset.pattern.permute.xlu0 0
    %1164 = vperm.xlu0 %1163, %v29
    %v1165 = vpop.permute.xlu0 %1164
    %v1167 = vmul.f32 %v1071, %v1090
    %v1168 = vmul.f32 %v1072, %v1095
    %v1169 = vmul.f32 %v1073, %v1100
    %v1170 = vmul.f32 %v1074, %v1105
    %v1171 = vmul.f32 %v1075, %v1110
    %v1172 = vmul.f32 %v1076, %v1115
    %v1173 = vmul.f32 %v1077, %v1120
    %v1174 = vmul.f32 %v1078, %v1125
    %v1175 = vmul.f32 %v1079, %v1130
    %v1176 = vmul.f32 %v1080, %v1135
    %v1177 = vmul.f32 %v1081, %v1140
    %v1178 = vmul.f32 %v1082, %v1145
    %v1179 = vmul.f32 %v1083, %v1150
    %v1180 = vmul.f32 %v1084, %v1155
    %v1181 = vmul.f32 %v1085, %v1160
    %v1182 = vmul.f32 %v1086, %v1165
    %vm1183 = vcmask 64512
    %v1184 = vsel %vm1183, %v1167, 0.0
    %v1185 = vsel %vm1183, %v1168, 0.0
    %v1186 = vadd.f32 %v1184, %v1185
    %v1187 = vsel %vm1183, %v1169, 0.0
    %v1188 = vadd.f32 %v1186, %v1187
    %v1189 = vsel %vm1183, %v1170, 0.0
    %v1190 = vadd.f32 %v1188, %v1189
    %v1191 = vsel %vm1183, %v1171, 0.0
    %v1192 = vadd.f32 %v1190, %v1191
    %v1193 = vsel %vm1183, %v1172, 0.0
    %v1194 = vadd.f32 %v1192, %v1193
    %v1195 = vsel %vm1183, %v1173, 0.0
    %v1196 = vadd.f32 %v1194, %v1195
    %v1197 = vsel %vm1183, %v1174, 0.0
    %v1198 = vadd.f32 %v1196, %v1197
    %v1199 = vsel %vm1183, %v1175, 0.0
    %v1200 = vadd.f32 %v1198, %v1199
    %v1201 = vsel %vm1183, %v1176, 0.0
    %v1202 = vadd.f32 %v1200, %v1201
    %v1203 = vsel %vm1183, %v1177, 0.0
    %v1204 = vadd.f32 %v1202, %v1203
    %v1205 = vsel %vm1183, %v1178, 0.0
    %v1206 = vadd.f32 %v1204, %v1205
    %v1207 = vsel %vm1183, %v1179, 0.0
    %v1208 = vadd.f32 %v1206, %v1207
    %v1209 = vsel %vm1183, %v1180, 0.0
    %v1210 = vadd.f32 %v1208, %v1209
    %v1211 = vsel %vm1183, %v1181, 0.0
    %v1212 = vadd.f32 %v1210, %v1211
    %v1213 = vsel %vm1183, %v1182, 0.0
    %v1214 = vadd.f32 %v1212, %v1213
    %v1215 = vrot.slane %v1214, 4
    %v1216 = vadd.f32 %v1214, %v1215
    %v1217 = vrot.slane %v1216, 2
    %v1218 = vadd.f32 %v1216, %v1217
    %v1219 = vrot.slane %v1218, 1
    %v1220 = vadd.f32 %v1218, %v1219
    %vm1221 = vcmask 57344
    %1222 = vst.msk [vmem:[#allocation2] sm:$0x1] %vm1221, %v1220
    // Predicated region
    $region10: #{tpu_custom_call.1} parent=1 // pred_check
      _
    $region11: #{tpu_custom_call.1} parent=1 // pred_check_branch
      %1224 = sbr.rel (0) target = $region13
    $region12: #{tpu_custom_call.1} parent=1 // pred_region
      %1226 = vsyncadd [#allocation3], 0
      %s1228 = sshll.u32 [#allocation2], 4
      %s1229 = int_to_ptr.vmem [resolvable:$true] %s1228
      %s1230 = sshll.u32 %s2, 4
      %s1231 = int_to_ptr.hbm [resolvable:$true] %s1230
      %1233 = dma.vmem_to_hbm [thread:$0]  %s1229, 16, %s1231, [#allocation3]
    $region13: #{tpu_custom_call.1} parent=1 // pred_fallthru
      _
    // Predicated region
    $region14: #{tpu_custom_call.1} parent=1 // pred_check
      _
    $region15: #{tpu_custom_call.1} parent=1 // pred_check_branch
      %1235 = sbr.rel (0) target = $region17
    $region16: #{tpu_custom_call.1} parent=1 // pred_region
      %1237 = dma.done [#allocation3], 16
    $region17: #{tpu_custom_call.1} parent=1 // pred_fallthru
      _
    %1238 = vsyncpa [#allocation3], 1

</llo_original>
